<compile_context>
chip_gen: v7x
topology: tpu7x:2x2x1
jax: 0.10.0
libtpu: 0.0.40
codegen_flags: <defaults>
</compile_context>

<pallas_src>
import jax
import jax.numpy as jnp
from jax import lax
from jax.experimental import pallas as pl
from jax.experimental.pallas import tpu as pltpu


def _round_up(v, m):
    return ((v + m - 1) // m) * m


def critic_kernel(x_ref, w1_ref, b1_ref, w2_ref, b2_ref, o_ref):
    # x_ref : (TM, dim_x)    streamed batch tile (final tile may be a partial
    #                        boundary block; its rows are sliced off outside)
    # w1_ref: (H_PAD, dim_x) resident layer-1 weight, PyTorch (out, in) layout
    # b1_ref: (H_PAD, 1)     resident layer-1 bias column
    # w2_ref: (8, H_PAD)     resident layer-2 weight (row 0 = w2, rows 1..7 = 0)
    # b2_ref: (1, 1) SMEM    layer-2 bias scalar
    # o_ref : (1, TM)        lane-dense output row for this tile

    # Layer 1 on the MXU: h[j, m] = sum_k W1[j, k] * x[m, k]  (A @ B^T, the
    # q.k^T pattern -> native transposed-RHS matmul, no vxpose of the x tile).
    h = lax.dot_general(
        w1_ref[...], x_ref[...],
        dimension_numbers=(((1,), (1,)), ((), ())),
        preferred_element_type=jnp.float32,
    )                                              # (H_PAD, TM) f32
    h = h + b1_ref[...]                            # lane-broadcast bias
    h = jnp.maximum(h, 0.01 * h)                   # LeakyReLU(0.01)

    # Layer 2 (50 -> 1) also on the MXU (it is nearly idle since K = dim_x is
    # tiny): (8, H_PAD) @ (H_PAD, TM) replaces ~H_PAD VPU mul/adds plus an XLU
    # sublane reduce per output vreg; row 0 is the real result and is already
    # lane-dense (1, TM) for an unmasked-width store.
    out8 = jnp.dot(w2_ref[...], h, preferred_element_type=jnp.float32)  # (8, TM)
    o_ref[...] = (out8[0:1, :] + b2_ref[0, 0]).astype(o_ref.dtype)


def _choose_tm(b_eff, row_bytes, h_pad, *,
               target_tile_bytes=2 << 20,     # ~2 MiB of streamed x per step
               vmem_budget_bytes=12 << 20):   # fits v5e 16MiB scoped / v7x 64MiB
    # Step-overhead target: large tiles amortize the ~0.35us per-grid-step cost.
    tm = _round_up(max(target_tile_bytes // row_bytes, 128), 128)
    # VMEM cap: 2x double-buffered x tile + ~3x (h_pad, tm) f32 temporaries.
    per_row = 2 * row_bytes + 3 * h_pad * 4
    tm = min(tm, max(128, (vmem_budget_bytes // per_row) // 128 * 128))
    # Never larger than the (128-aligned) batch.
    tm = min(tm, max(128, (b_eff // 128) * 128))
    # Keep >= 2 grid steps when the batch allows, so the "parallel" batch axis
    # actually splits across v7x's two TensorCores and the pipeline overlaps.
    if b_eff >= 256:
        tm = min(tm, max(128, ((b_eff // 2) // 128) * 128))
    return tm


def flexible_critic_forward(x, w1, b1, w2, b2):
    """Forward pass of FlexibleCriticNetwork.

    x : (B, dim_x)
    w1: (hidden, dim_x), b1: (hidden,), w2: (1, hidden), b2: (1,)  (PyTorch layout)
    Returns (B, 1) f32.
    """
    B, dim_x = x.shape
    hidden = w1.shape[0]
    # hidden is the SUBLANE axis of the (h_pad, TM) activations -> multiple of
    # 8 is enough; the lane-dense property comes from TM, not from hidden.
    h_pad = _round_up(max(hidden, 8), 8)

    # Stream x in its own dtype (no wrapper-side cast); cast only the tiny
    # resident weights.  If x is natively bf16 this halves streamed HBM bytes.
    wdt = x.dtype
    w1p = jnp.zeros((h_pad, dim_x), wdt).at[:hidden].set(w1.astype(wdt))
    b1p = jnp.zeros((h_pad, 1), jnp.float32).at[:hidden, 0].set(
        b1.astype(jnp.float32))
    w2p = jnp.zeros((8, h_pad), jnp.float32).at[0, :hidden].set(
        w2.reshape(hidden).astype(jnp.float32))
    b2p = b2.reshape(1, 1).astype(jnp.float32)

    # No full pad-copy of x: only batches smaller than one 128-row tile get a
    # tiny remainder pad; otherwise x goes straight in and the final grid step
    # is a partial boundary block (its rows are sliced off below).
    if B < 128:
        xp = jnp.pad(x, ((0, 128 - B), (0, 0)))
        b_eff = 128
    else:
        xp = x
        b_eff = B

    itemsize = jnp.dtype(xp.dtype).itemsize
    row_bytes = max(dim_x * itemsize, 1)
    tm = _choose_tm(b_eff, row_bytes, h_pad)
    num_tiles = pl.cdiv(b_eff, tm)
    b_span = num_tiles * tm

    flops = int(2 * b_span * dim_x * h_pad      # layer 1 (MXU)
                + 2 * b_span * h_pad * 8        # layer 2 (MXU, 8 rows)
                + 3 * b_span * h_pad)           # bias + leaky relu (VPU)
    bytes_accessed = int(b_eff * row_bytes             # streamed x (dominant)
                         + h_pad * dim_x * itemsize    # w1 (resident)
                         + (h_pad + 8 * h_pad) * 4 + 4  # b1, w2, b2
                         + b_span * 4)                  # output

    out_tiles = pl.pallas_call(
        critic_kernel,
        out_shape=jax.ShapeDtypeStruct((num_tiles, tm), jnp.float32),
        grid=(num_tiles,),
        in_specs=[
            pl.BlockSpec((tm, dim_x), lambda i: (i, 0)),        # x: streamed tiles
            pl.BlockSpec((h_pad, dim_x), lambda i: (0, 0)),     # w1: resident
            pl.BlockSpec((h_pad, 1), lambda i: (0, 0)),         # b1: resident
            pl.BlockSpec((8, h_pad), lambda i: (0, 0)),         # w2: resident
            pl.BlockSpec(memory_space=pltpu.MemorySpace.SMEM),  # b2: scalar
        ],
        out_specs=pl.BlockSpec((1, tm), lambda i: (i, 0)),      # lane-dense rows
        compiler_params=pltpu.CompilerParams(
            dimension_semantics=("parallel",),        # megacore split on v7x
            vmem_limit_bytes=32 * 1024 * 1024,
        ),
        cost_estimate=pl.CostEstimate(
            flops=flops, transcendentals=0, bytes_accessed=bytes_accessed),
    )(xp, w1p, b1p, w2p, b2p)

    return out_tiles.reshape(b_span)[:B].reshape(B, 1)


def init_params(key, dim_x, hidden=50):
    # PyTorch-style init, PyTorch layout: W (out_features, in_features).
    k1, k2, k3, k4 = jax.random.split(key, 4)
    bound1 = 1.0 / jnp.sqrt(dim_x)
    bound2 = 1.0 / jnp.sqrt(hidden)
    w1 = jax.random.uniform(k1, (hidden, dim_x), jnp.float32, -bound1, bound1)
    b1 = jax.random.uniform(k2, (hidden,), jnp.float32, -bound1, bound1)
    w2 = jax.random.uniform(k3, (1, hidden), jnp.float32, -bound2, bound2)
    b2 = jax.random.uniform(k4, (1,), jnp.float32, -bound2, bound2)
    return w1, b1, w2, b2


def reference_forward(x, w1, b1, w2, b2):
    h = x @ w1.T + b1
    h = jnp.where(h > 0, h, 0.01 * h)
    return h @ w2.T + b2


if __name__ == "__main__":
    dim_x = 32
    batch = 8

    key = jax.random.PRNGKey(0)
    kx, kp, kx2 = jax.random.split(key, 3)
    x = jax.random.normal(kx, (batch, dim_x), jnp.float32)
    w1, b1, w2, b2 = init_params(kp, dim_x)

    # Small single-tile case (B < 128 -> tiny remainder pad path).
    out = jax.block_until_ready(flexible_critic_forward(x, w1, b1, w2, b2))
    ref = reference_forward(x, w1, b1, w2, b2)
    assert out.shape == (batch, 1)
    assert jnp.allclose(out, ref, atol=1e-4, rtol=1e-4)

    # Multi-tile case: 600 rows, no wrapper pad/copy, 3 tiles of 256 with a
    # partial final boundary block (exercises grid, resident weights, slicing).
    x2 = jax.random.normal(kx2, (600, dim_x), jnp.float32)
    out2 = jax.block_until_ready(flexible_critic_forward(x2, w1, b1, w2, b2))
    ref2 = reference_forward(x2, w1, b1, w2, b2)
    assert out2.shape == (600, 1)
    assert jnp.allclose(out2, ref2, atol=1e-4, rtol=1e-4)

    print("KERNEL_OK")
</pallas_src>

<mosaic_0001>
module attributes {stable_mosaic.version = 11 : i64} {
  func.func @critic_kernel(%arg0: i32, %arg1: memref<128x32xf32, #tpu.memory_space<vmem>>, %arg2: memref<56x32xf32, #tpu.memory_space<vmem>>, %arg3: memref<56x1xf32, #tpu.memory_space<vmem>>, %arg4: memref<8x56xf32, #tpu.memory_space<vmem>>, %arg5: memref<1x1xf32, #tpu.memory_space<smem>>, %arg6: memref<1x128xf32, #tpu.memory_space<vmem>>) attributes {dimension_semantics = [#tpu.dimension_semantics<parallel>], iteration_bounds = array<i64: 1>, scalar_prefetch = 0 : i64, scratch_operands = 0 : i64, tpu.core_type = #tpu.core_type<tc>, window_params = [{transform_indices = @transform_0, window_bounds = array<i64: 128, 32>}, {pipeline_mode = #tpu.pipeline_mode<synchronous>, transform_indices = @transform_1, window_bounds = array<i64: 56, 32>}, {pipeline_mode = #tpu.pipeline_mode<synchronous>, transform_indices = @transform_2, window_bounds = array<i64: 56, 1>}, {pipeline_mode = #tpu.pipeline_mode<synchronous>, transform_indices = @transform_3, window_bounds = array<i64: 8, 56>}, {transform_indices = @transform_4, window_bounds = array<i64: 1, 1>}, {transform_indices = @transform_5, window_bounds = array<i64: 1, 128>}]} {
    %c0 = arith.constant 0 : index
    %c0_0 = arith.constant 0 : index
    %0 = vector.load %arg2[%c0, %c0_0] : memref<56x32xf32, #tpu.memory_space<vmem>>, vector<56x32xf32>
    %c0_1 = arith.constant 0 : index
    %c0_2 = arith.constant 0 : index
    %1 = vector.load %arg1[%c0_1, %c0_2] : memref<128x32xf32, #tpu.memory_space<vmem>>, vector<128x32xf32>
    %cst = arith.constant dense<0.000000e+00> : vector<56x128xf32>
    %2 = tpu.matmul %0, %1, %cst {dimension_numbers = #tpu.dot_dimension_numbers<[1], [1], [0], [0], [0, 0, 1, 0], [], []>} : vector<56x32xf32>, vector<128x32xf32>, vector<56x128xf32> -> vector<56x128xf32>
    %c0_3 = arith.constant 0 : index
    %c0_4 = arith.constant 0 : index
    %3 = vector.load %arg3[%c0_3, %c0_4] : memref<56x1xf32, #tpu.memory_space<vmem>>, vector<56x1xf32>
    %4 = vector.broadcast %3 : vector<56x1xf32> to vector<56x128xf32>
    %5 = arith.addf %2, %4 : vector<56x128xf32>
    %cst_5 = arith.constant 0.00999999977 : f32
    %6 = vector.broadcast %cst_5 : f32 to vector<56x128xf32>
    %7 = arith.mulf %6, %5 : vector<56x128xf32>
    %8 = arith.maximumf %5, %7 : vector<56x128xf32>
    %c0_6 = arith.constant 0 : index
    %c0_7 = arith.constant 0 : index
    %9 = vector.load %arg4[%c0_6, %c0_7] : memref<8x56xf32, #tpu.memory_space<vmem>>, vector<8x56xf32>
    %cst_8 = arith.constant dense<0.000000e+00> : vector<8x128xf32>
    %10 = tpu.matmul %9, %8, %cst_8 {dimension_numbers = #tpu.dot_dimension_numbers<[1], [0], [0], [1], [0, 0, 1, 1], [], []>} : vector<8x56xf32>, vector<56x128xf32>, vector<8x128xf32> -> vector<8x128xf32>
    %11 = vector.extract_strided_slice %10 {offsets = [0, 0], sizes = [1, 128], strides = [1, 1]} : vector<8x128xf32> to vector<1x128xf32>
    %c0_9 = arith.constant 0 : index
    %c0_10 = arith.constant 0 : index
    %12 = memref.load %arg5[%c0_9, %c0_10] : memref<1x1xf32, #tpu.memory_space<smem>>
    %13 = vector.broadcast %12 : f32 to vector<1x128xf32>
    %14 = arith.addf %11, %13 : vector<1x128xf32>
    %c0_11 = arith.constant 0 : index
    %c0_12 = arith.constant 0 : index
    %15 = vector.load %arg6[%c0_11, %c0_12] : memref<1x128xf32, #tpu.memory_space<vmem>>, vector<1x128xf32>
    tpu.vector_store %arg6[%c0_11, %c0_12], %14 {strides = array<i32>} : memref<1x128xf32, #tpu.memory_space<vmem>>, vector<1x128xf32>,
    return
  }
  func.func @transform_0(%arg0: i32) -> (i32, i32) {
    %c0_i32 = arith.constant 0 : i32
    %c0_i32_0 = arith.constant 0 : i32
    return %arg0, %c0_i32 : i32, i32
  }
  func.func @transform_1(%arg0: i32) -> (i32, i32) {
    %c0_i32 = arith.constant 0 : i32
    %c0_i32_0 = arith.constant 0 : i32
    %c0_i32_1 = arith.constant 0 : i32
    return %c0_i32, %c0_i32_0 : i32, i32
  }
  func.func @transform_2(%arg0: i32) -> (i32, i32) {
    %c0_i32 = arith.constant 0 : i32
    %c0_i32_0 = arith.constant 0 : i32
    %c0_i32_1 = arith.constant 0 : i32
    return %c0_i32, %c0_i32_0 : i32, i32
  }
  func.func @transform_3(%arg0: i32) -> (i32, i32) {
    %c0_i32 = arith.constant 0 : i32
    %c0_i32_0 = arith.constant 0 : i32
    %c0_i32_1 = arith.constant 0 : i32
    return %c0_i32, %c0_i32_0 : i32, i32
  }
  func.func @transform_4(%arg0: i32) -> (i32, i32) {
    %c0_i32 = arith.constant 0 : i32
    %c0_i32_0 = arith.constant 0 : i32
    %c0_i32_1 = arith.constant 0 : i32
    return %c0_i32, %c0_i32_0 : i32, i32
  }
  func.func @transform_5(%arg0: i32) -> (i32, i32) {
    %c0_i32 = arith.constant 0 : i32
    %c0_i32_0 = arith.constant 0 : i32
    return %arg0, %c0_i32 : i32, i32
  }
}

</mosaic_0001>

<llo_original>
// kernel: tpu_custom_call.1
$region0: #{tpu_custom_call.1}
  #allocation0 [shape = 'u32[]', space=smem, size = 0x4, offset = 0x4, fixed_abs, tag = 'smem constant byte address 0x4 - core index']
  #allocation1 [shape = 'u32[144,128]{1,0:T(1,128)}', space=vmem, size = 0x12000, scoped, tag = 'internal scratch']
  #allocation2 [shape = 'f32[1,1]{1,0:T(1,128)S(6)}', space=smem, size = 0x200, scoped, tag = 'scoped memory for tpu_custom_call.1']
  %s0 = inlined_call_operand.vmem [shape: f32[128,32], index: 0, kind: input, shape index: {}]
  %s1 = inlined_call_operand.vmem [shape: f32[56,32], index: 1, kind: input, shape index: {}]
  %s2 = inlined_call_operand.vmem [shape: f32[56,1], index: 2, kind: input, shape index: {}]
  %s3 = inlined_call_operand.vmem [shape: f32[8,56], index: 3, kind: input, shape index: {}]
  %s4 = inlined_call_operand.<no memory space> [shape: f32[1,1], index: 4, kind: input, shape index: {}]
  %s5 = inlined_call_operand.hbm [shape: f32[1,128], index: 5, kind: output, shape index: {}]
  %s6 = sld [smem:[#allocation0]]
  $region30: #{tpu_custom_call.1} parent=0
    _
  %s8 = ssub.s32 1, %s6
  %s9 = scalar_select 0, %s8, %s6
  %10 = sst [smem:[#allocation2]] %s4
  $region1: #{tpu_custom_call.1} parent=0
    #allocation3 [shape = 'u8[512]{0}', space=vmem, size = 0x400, scoped, tag = 'output window, operand 0, single buffered']
    #allocation4 [shape = 's32[1]{0}', space=sflag, size = 0x4, scoped, tag = 'scoped memory for tpu_custom_call.1']
    %11 = vsyncpa [#allocation4], 0
    // Predicated region
    $region2: #{tpu_custom_call.1} parent=1 // pred_check
      _
    $region3: #{tpu_custom_call.1} parent=1 // pred_check_branch
      %13 = sbr.rel (0) target = $region5
    $region4: #{tpu_custom_call.1} parent=1 // pred_region
      _
    $region5: #{tpu_custom_call.1} parent=1 // pred_fallthru
      _
    // Predicated region
    $region6: #{tpu_custom_call.1} parent=1 // pred_check
      _
    $region7: #{tpu_custom_call.1} parent=1 // pred_check_branch
      %15 = sbr.rel (0) target = $region9
    $region8: #{tpu_custom_call.1} parent=1 // pred_region
      _
    $region9: #{tpu_custom_call.1} parent=1 // pred_fallthru
      _
    // Predicated region
    $region10: #{tpu_custom_call.1} parent=1 // pred_check
      _
    $region11: #{tpu_custom_call.1} parent=1 // pred_check_branch
      %17 = sbr.rel (0) target = $region13
    $region12: #{tpu_custom_call.1} parent=1 // pred_region
      _
    $region13: #{tpu_custom_call.1} parent=1 // pred_fallthru
      _
    // Predicated region
    $region14: #{tpu_custom_call.1} parent=1 // pred_check
      _
    $region15: #{tpu_custom_call.1} parent=1 // pred_check_branch
      %19 = sbr.rel (0) target = $region17
    $region16: #{tpu_custom_call.1} parent=1 // pred_region
      _
    $region17: #{tpu_custom_call.1} parent=1 // pred_fallthru
      _
    // Predicated region
    $region18: #{tpu_custom_call.1} parent=1 // pred_check
      _
    $region19: #{tpu_custom_call.1} parent=1 // pred_check_branch
      %21 = sbr.rel (0) target = $region21
    $region20: #{tpu_custom_call.1} parent=1 // pred_region
      _
    $region21: #{tpu_custom_call.1} parent=1 // pred_fallthru
      _
    %v22 = vld [vmem:[%s1] sm:$0xff]
    %v23 = vld [vmem:[%s1 + $0x8] sm:$0xff]
    %v24 = vld [vmem:[%s1 + $0x10] sm:$0xff]
    %v25 = vld [vmem:[%s1 + $0x18] sm:$0xff]
    %v26 = vld [vmem:[%s1 + $0x20] sm:$0xff]
    %v27 = vld [vmem:[%s1 + $0x28] sm:$0xff]
    %v28 = vld [vmem:[%s1 + $0x30] sm:$0xff]
    %v29 = vld [vmem:[%s0] sm:$0xff]
    %v30 = vld [vmem:[%s0 + $0x8] sm:$0xff]
    %v31 = vld [vmem:[%s0 + $0x10] sm:$0xff]
    %v32 = vld [vmem:[%s0 + $0x18] sm:$0xff]
    %v33 = vld [vmem:[%s0 + $0x20] sm:$0xff]
    %v34 = vld [vmem:[%s0 + $0x28] sm:$0xff]
    %v35 = vld [vmem:[%s0 + $0x30] sm:$0xff]
    %v36 = vld [vmem:[%s0 + $0x38] sm:$0xff]
    %v37 = vld [vmem:[%s0 + $0x40] sm:$0xff]
    %v38 = vld [vmem:[%s0 + $0x48] sm:$0xff]
    %v39 = vld [vmem:[%s0 + $0x50] sm:$0xff]
    %v40 = vld [vmem:[%s0 + $0x58] sm:$0xff]
    %v41 = vld [vmem:[%s0 + $0x60] sm:$0xff]
    %v42 = vld [vmem:[%s0 + $0x68] sm:$0xff]
    %v43 = vld [vmem:[%s0 + $0x70] sm:$0xff]
    %v44 = vld [vmem:[%s0 + $0x78] sm:$0xff]
    %v45 = vld [vmem:[%s2] sm:$0xff]
    %v46 = vld [vmem:[%s2 + $0x8] sm:$0xff]
    %v47 = vld [vmem:[%s2 + $0x10] sm:$0xff]
    %v48 = vld [vmem:[%s2 + $0x18] sm:$0xff]
    %v49 = vld [vmem:[%s2 + $0x20] sm:$0xff]
    %v50 = vld [vmem:[%s2 + $0x28] sm:$0xff]
    %v51 = vld [vmem:[%s2 + $0x30] sm:$0xff]
    %53 = vset.pattern.permute.xlu0 0
    %54 = vperm.xlu0 %53, %v45
    %v55 = vpop.permute.xlu0 %54
    %58 = vset.pattern.permute.xlu0 0
    %59 = vperm.xlu0 %58, %v46
    %v60 = vpop.permute.xlu0 %59
    %63 = vset.pattern.permute.xlu0 0
    %64 = vperm.xlu0 %63, %v47
    %v65 = vpop.permute.xlu0 %64
    %68 = vset.pattern.permute.xlu0 0
    %69 = vperm.xlu0 %68, %v48
    %v70 = vpop.permute.xlu0 %69
    %73 = vset.pattern.permute.xlu0 0
    %74 = vperm.xlu0 %73, %v49
    %v75 = vpop.permute.xlu0 %74
    %78 = vset.pattern.permute.xlu0 0
    %79 = vperm.xlu0 %78, %v50
    %v80 = vpop.permute.xlu0 %79
    %83 = vset.pattern.permute.xlu0 0
    %84 = vperm.xlu0 %83, %v51
    %v85 = vpop.permute.xlu0 %84
    %vm87 = vcmask 261120
    %v89 = vsel %vm87, %v22, 0
    %v92 = vsel %vm87, %v23, 0
    %v95 = vsel %vm87, %v24, 0
    %v98 = vsel %vm87, %v25, 0
    %v101 = vsel %vm87, %v26, 0
    %v104 = vsel %vm87, %v27, 0
    %v107 = vsel %vm87, %v28, 0
    %v110 = vsel %vm87, %v29, 0
    %v113 = vsel %vm87, %v30, 0
    %v116 = vsel %vm87, %v31, 0
    %v119 = vsel %vm87, %v32, 0
    %v122 = vsel %vm87, %v33, 0
    %v125 = vsel %vm87, %v34, 0
    %v128 = vsel %vm87, %v35, 0
    %v131 = vsel %vm87, %v36, 0
    %v134 = vsel %vm87, %v37, 0
    %v137 = vsel %vm87, %v38, 0
    %v140 = vsel %vm87, %v39, 0
    %v143 = vsel %vm87, %v40, 0
    %v146 = vsel %vm87, %v41, 0
    %v149 = vsel %vm87, %v42, 0
    %v152 = vsel %vm87, %v43, 0
    %v155 = vsel %vm87, %v44, 0
    %157 = vmatprep.subr.mxu0 0.0
    %158 = vmatpush1.xpose.msra.mxu0 %v110
    %159 = vmatprep.subr.mxu0 0.0
    %160 = vmatpush1.xpose.msra.mxu0 %v113
    %161 = vmatprep.subr.mxu0 0.0
    %162 = vmatpush1.xpose.msra.mxu0 %v116
    %163 = vmatprep.subr.mxu0 0.0
    %164 = vmatpush1.xpose.msra.mxu0 %v119
    %165 = vmatprep.subr.mxu0 0.0
    %166 = vmatpush1.xpose.msra.mxu0 %v122
    %167 = vmatprep.subr.mxu0 0.0
    %168 = vmatpush1.xpose.msra.mxu0 %v125
    %169 = vmatprep.subr.mxu0 0.0
    %170 = vmatpush1.xpose.msra.mxu0 %v128
    %171 = vmatprep.subr.mxu0 0.0
    %172 = vmatpush1.xpose.msra.mxu0 %v131
    %173 = vmatprep.subr.mxu0 0.0
    %174 = vmatpush1.xpose.msra.mxu0 %v134
    %175 = vmatprep.subr.mxu0 0.0
    %176 = vmatpush1.xpose.msra.mxu0 %v137
    %177 = vmatprep.subr.mxu0 0.0
    %178 = vmatpush1.xpose.msra.mxu0 %v140
    %179 = vmatprep.subr.mxu0 0.0
    %180 = vmatpush1.xpose.msra.mxu0 %v143
    %181 = vmatprep.subr.mxu0 0.0
    %182 = vmatpush1.xpose.msra.mxu0 %v146
    %183 = vmatprep.subr.mxu0 0.0
    %184 = vmatpush1.xpose.msra.mxu0 %v149
    %185 = vmatprep.subr.mxu0 0.0
    %186 = vmatpush1.xpose.msra.mxu0 %v152
    %187 = vmatprep.subr.mxu0 0.0
    %188 = vmatpush1.xpose.msra.mxu0 %v155
    %189 = vmatprep.subr.mxu0 0.0
    %190 = vmatpush1.xpose.msra.mxu0 0.0
    %191 = vmatprep.subr.mxu0 0.0
    %192 = vmatpush1.xpose.msra.mxu0 0.0
    %193 = vmatprep.subr.mxu0 0.0
    %194 = vmatpush1.xpose.msra.mxu0 0.0
    %195 = vmatprep.subr.mxu0 0.0
    %196 = vmatpush1.xpose.msra.mxu0 0.0
    %197 = vmatprep.subr.mxu0 0.0
    %198 = vmatpush1.xpose.msra.mxu0 0.0
    %199 = vmatprep.subr.mxu0 0.0
    %200 = vmatpush1.xpose.msra.mxu0 0.0
    %201 = vmatprep.subr.mxu0 0.0
    %202 = vmatpush1.xpose.msra.mxu0 0.0
    %203 = vmatprep.subr.mxu0 0.0
    %204 = vmatpush1.xpose.msra.mxu0 0.0
    %205 = vmatprep.subr.mxu0 0.0
    %206 = vmatpush1.xpose.msra.mxu0 0.0
    %207 = vmatprep.subr.mxu0 0.0
    %208 = vmatpush1.xpose.msra.mxu0 0.0
    %209 = vmatprep.subr.mxu0 0.0
    %210 = vmatpush1.xpose.msra.mxu0 0.0
    %211 = vmatprep.subr.mxu0 0.0
    %212 = vmatpush1.xpose.msra.mxu0 0.0
    %213 = vmatprep.subr.mxu0 0.0
    %214 = vmatpush1.xpose.msra.mxu0 0.0
    %215 = vmatprep.subr.mxu0 0.0
    %216 = vmatpush1.xpose.msra.mxu0 0.0
    %217 = vmatprep.subr.mxu0 0.0
    %218 = vmatpush1.xpose.msra.mxu0 0.0
    %219 = vmatprep.subr.mxu0 0.0
    %220 = vmatpush1.xpose.msra.mxu0 0.0
    %221 = vmatprep.mubr.f32.mxu0 0.0
    %222 = vmatmul.mubr.f32.gmra.mrb[0].mxu0 %v89
    %v223 = vpop.f32.mrb[0].mxu0
    %v224 = vadd.f32 %v55, %v223
    %v225 = vpop.f32.mrb[0].mxu0
    %226 = vmatprep.mubr.f32.mxu0 0.0
    %227 = vmatmul.mubr.f32.gmra.mrb[0].mxu0 %v92
    %v228 = vpop.f32.mrb[0].mxu0
    %v229 = vadd.f32 %v60, %v228
    %v230 = vpop.f32.mrb[0].mxu0
    %231 = vmatprep.mubr.f32.mxu0 0.0
    %232 = vmatmul.mubr.f32.gmra.mrb[0].mxu0 %v95
    %v233 = vpop.f32.mrb[0].mxu0
    %v234 = vadd.f32 %v65, %v233
    %v235 = vpop.f32.mrb[0].mxu0
    %236 = vmatprep.mubr.f32.mxu0 0.0
    %237 = vmatmul.mubr.f32.gmra.mrb[0].mxu0 %v98
    %v238 = vpop.f32.mrb[0].mxu0
    %v239 = vadd.f32 %v70, %v238
    %v240 = vpop.f32.mrb[0].mxu0
    %241 = vmatprep.mubr.f32.mxu0 0.0
    %242 = vmatmul.mubr.f32.gmra.mrb[0].mxu0 %v101
    %v243 = vpop.f32.mrb[0].mxu0
    %v244 = vadd.f32 %v75, %v243
    %v245 = vpop.f32.mrb[0].mxu0
    %246 = vmatprep.mubr.f32.mxu0 0.0
    %247 = vmatmul.mubr.f32.gmra.mrb[0].mxu0 %v104
    %v248 = vpop.f32.mrb[0].mxu0
    %v249 = vadd.f32 %v80, %v248
    %v250 = vpop.f32.mrb[0].mxu0
    %251 = vmatprep.mubr.f32.mxu0 0.0
    %252 = vmatmul.mubr.f32.gmra.mrb[0].mxu0 %v107
    %v253 = vpop.f32.mrb[0].mxu0
    %v254 = vadd.f32 %v85, %v253
    %v255 = vpop.f32.mrb[0].mxu0
    %256 = vdwg.mxu0
    %v257 = vmul.f32 %v224, 0.01
    %v258 = vmul.f32 %v229, 0.01
    %v259 = vmul.f32 %v234, 0.01
    %v260 = vmul.f32 %v239, 0.01
    %v261 = vmul.f32 %v244, 0.01
    %v262 = vmul.f32 %v249, 0.01
    %v263 = vmul.f32 %v254, 0.01
    %v264 = vmax.f32 %v224, %v257
    %v265 = vmax.f32 %v229, %v258
    %v266 = vmax.f32 %v234, %v259
    %v267 = vmax.f32 %v239, %v260
    %v268 = vmax.f32 %v244, %v261
    %v269 = vmax.f32 %v249, %v262
    %v270 = vmax.f32 %v254, %v263
    %v271 = vld [vmem:[%s3] sm:$0xff]
    %vm272 = vcmask 457728
    %v274 = vsel %vm272, %v271, 0
    %276 = vmatprep.subr.mxu0 0.0
    %277 = vmatpush1.msra.mxu0 %v264
    %278 = vmatprep.subr.mxu0 0.0
    %279 = vmatpush1.msra.mxu0 %v265
    %280 = vmatprep.subr.mxu0 0.0
    %281 = vmatpush1.msra.mxu0 %v266
    %282 = vmatprep.subr.mxu0 0.0
    %283 = vmatpush1.msra.mxu0 %v267
    %284 = vmatprep.subr.mxu0 0.0
    %285 = vmatpush1.msra.mxu0 %v268
    %286 = vmatprep.subr.mxu0 0.0
    %287 = vmatpush1.msra.mxu0 %v269
    %288 = vmatprep.subr.mxu0 0.0
    %289 = vmatpush1.msra.mxu0 %v270
    %290 = vmatprep.subr.mxu0 0.0
    %291 = vmatpush1.msra.mxu0 0.0
    %292 = vmatprep.subr.mxu0 0.0
    %293 = vmatpush1.msra.mxu0 0.0
    %294 = vmatprep.subr.mxu0 0.0
    %295 = vmatpush1.msra.mxu0 0.0
    %296 = vmatprep.subr.mxu0 0.0
    %297 = vmatpush1.msra.mxu0 0.0
    %298 = vmatprep.subr.mxu0 0.0
    %299 = vmatpush1.msra.mxu0 0.0
    %300 = vmatprep.subr.mxu0 0.0
    %301 = vmatpush1.msra.mxu0 0.0
    %302 = vmatprep.subr.mxu0 0.0
    %303 = vmatpush1.msra.mxu0 0.0
    %304 = vmatprep.subr.mxu0 0.0
    %305 = vmatpush1.msra.mxu0 0.0
    %306 = vmatprep.subr.mxu0 0.0
    %307 = vmatpush1.msra.mxu0 0.0
    %308 = vmatprep.subr.mxu0 0.0
    %309 = vmatpush1.msra.mxu0 0.0
    %310 = vmatprep.subr.mxu0 0.0
    %311 = vmatpush1.msra.mxu0 0.0
    %312 = vmatprep.subr.mxu0 0.0
    %313 = vmatpush1.msra.mxu0 0.0
    %314 = vmatprep.subr.mxu0 0.0
    %315 = vmatpush1.msra.mxu0 0.0
    %316 = vmatprep.subr.mxu0 0.0
    %317 = vmatpush1.msra.mxu0 0.0
    %318 = vmatprep.subr.mxu0 0.0
    %319 = vmatpush1.msra.mxu0 0.0
    %320 = vmatprep.subr.mxu0 0.0
    %321 = vmatpush1.msra.mxu0 0.0
    %322 = vmatprep.subr.mxu0 0.0
    %323 = vmatpush1.msra.mxu0 0.0
    %324 = vmatprep.subr.mxu0 0.0
    %325 = vmatpush1.msra.mxu0 0.0
    %326 = vmatprep.subr.mxu0 0.0
    %327 = vmatpush1.msra.mxu0 0.0
    %328 = vmatprep.subr.mxu0 0.0
    %329 = vmatpush1.msra.mxu0 0.0
    %330 = vmatprep.subr.mxu0 0.0
    %331 = vmatpush1.msra.mxu0 0.0
    %332 = vmatprep.subr.mxu0 0.0
    %333 = vmatpush1.msra.mxu0 0.0
    %334 = vmatprep.subr.mxu0 0.0
    %335 = vmatpush1.msra.mxu0 0.0
    %336 = vmatprep.subr.mxu0 0.0
    %337 = vmatpush1.msra.mxu0 0.0
    %338 = vmatprep.subr.mxu0 0.0
    %339 = vmatpush1.msra.mxu0 0.0
    %340 = vmatprep.mubr.f32.mxu0 0.0
    %341 = vmatmul.mubr.f32.gmra.mrb[0].mxu0 %v274
    %v342 = vpop.f32.mrb[0].mxu0
    %v343 = vadd.f32 0.0, %v342
    %v344 = vpop.f32.mrb[0].mxu0
    %345 = vdwg.mxu0
    %s346 = sld [smem:[#allocation2]]
    %v347 = vstv %s346
    %v348 = vadd.f32 %v343, %v347
    %349 = vst [vmem:[#allocation3] sm:$0x1] %v348
    // Predicated region
    $region22: #{tpu_custom_call.1} parent=1 // pred_check
      _
    $region23: #{tpu_custom_call.1} parent=1 // pred_check_branch
      %351 = sbr.rel (0) target = $region25
    $region24: #{tpu_custom_call.1} parent=1 // pred_region
      %s353 = ssub.s32 16, 16
      %354 = vsyncadd [#allocation4], %s353
      %s356 = sshll.u32 [#allocation3], 4
      %s357 = int_to_ptr.vmem [resolvable:$true] %s356
      %359 = dma.vmem_to_hbm [thread:$0]  %s357, 16, %s5, [#allocation4]
    $region25: #{tpu_custom_call.1} parent=1 // pred_fallthru
      _
    // Predicated region
    $region26: #{tpu_custom_call.1} parent=1 // pred_check
      _
    $region27: #{tpu_custom_call.1} parent=1 // pred_check_branch
      %361 = sbr.rel (0) target = $region29
    $region28: #{tpu_custom_call.1} parent=1 // pred_region
      %362 = dma.done [#allocation4], 16
    $region29: #{tpu_custom_call.1} parent=1 // pred_fallthru
      _
    %363 = vsyncpa [#allocation4], 1

</llo_original>
